<compile_context>
chip_gen: v6e
topology: v6e:2x2x1
jax: 0.10.0
libtpu: 0.0.40
codegen_flags: <defaults>
</compile_context>

<pallas_src>
import jax
import jax.numpy as jnp
from jax.experimental import pallas as pl
from jax.experimental.pallas import tpu as pltpu


# ----------------------------- Pallas kernel ------------------------------

def drelu_kernel(x_ref, tp_ref, tm_ref, ap_ref, amh_ref, o_ref):
    x = x_ref[...].astype(jnp.float32)           # (TB, TF)
    zero = jnp.zeros_like(x)
    pos = jnp.maximum(x, zero)
    neg = jnp.minimum(x, zero)

    ap = ap_ref[...]                             # (1, TF) f32, broadcast over rows
    amh = amh_ref[...]                           # 0.5 * a_minus, pre-folded
    tp = tp_ref[...]
    tm = tm_ref[...]

    # Horner form: pos*(ap*pos + tp) + neg*(0.5*am*neg + tm)
    out = pos * (ap * pos + tp) + neg * (amh * neg + tm)
    o_ref[...] = out.astype(o_ref.dtype)


# ------------------------------- wrapper -----------------------------------

def _round_up(n, m):
    return ((n + m - 1) // m) * m


def drelu_pallas(x, theta_plus, theta_minus, a_plus, a_minus):
    """x: (..., F) array. Per-feature params: (F,). Returns (..., F) array.

    Output dtype follows the torch module (promotion with float32 -> float32).
    """
    orig_shape = x.shape
    F = orig_shape[-1]
    out_dtype = jnp.promote_types(x.dtype, jnp.float32)  # torch promotes to f32

    x2 = x.reshape(-1, F)                        # native dtype, no upcast pass
    R = x2.shape[0]
    if R == 0:
        return jnp.zeros(orig_shape, out_dtype)

    in_bytes = jnp.dtype(x2.dtype).itemsize
    out_bytes = jnp.dtype(out_dtype).itemsize
    elem = max(in_bytes, out_bytes)

    # --- tile sizing from a VMEM budget (~2 MiB per buffer tile) ---
    TILE_BYTES = 2 * 1024 * 1024
    ROW_TARGET = 2048  # keep row tiles large; tile features only when F is huge

    if F % 128 == 0 and F * elem * ROW_TARGET > TILE_BYTES:
        tf = max(128, min(F, (TILE_BYTES // (ROW_TARGET * elem)) // 128 * 128))
    else:
        tf = F  # full feature extent (always legal as a block dim)

    tb = max(8, (TILE_BYTES // max(1, tf * elem)) // 8 * 8)
    tb = min(tb, _round_up(R, 8))
    # Keep >= 2 row blocks when possible so v7x's two TensorCores both work.
    if R > 8 and pl.cdiv(R, tb) < 2:
        tb = max(8, _round_up(pl.cdiv(R, 2), 8))

    n_rb = pl.cdiv(R, tb)
    n_fb = pl.cdiv(F, tf)

    # Per-feature params as (1, F) f32; pre-fold the 0.5 into a_minus.
    tp = theta_plus.reshape(1, F).astype(jnp.float32)
    tm = theta_minus.reshape(1, F).astype(jnp.float32)
    ap = a_plus.reshape(1, F).astype(jnp.float32)
    amh = (0.5 * a_minus.astype(jnp.float32)).reshape(1, F)

    data_spec = pl.BlockSpec((tb, tf), lambda i, j: (i, j))
    param_spec = pl.BlockSpec((1, tf), lambda i, j: (0, j))

    cost = pl.CostEstimate(
        flops=9 * R * F,
        transcendentals=0,
        bytes_accessed=R * F * (in_bytes + out_bytes) + 4 * F * 4,
    )

    out = pl.pallas_call(
        drelu_kernel,
        out_shape=jax.ShapeDtypeStruct((R, F), out_dtype),
        grid=(n_rb, n_fb),
        in_specs=[
            data_spec,    # x tile
            param_spec,   # theta_plus
            param_spec,   # theta_minus
            param_spec,   # a_plus
            param_spec,   # 0.5 * a_minus
        ],
        out_specs=data_spec,
        compiler_params=pltpu.CompilerParams(
            dimension_semantics=("parallel", "parallel"),
            vmem_limit_bytes=48 * 1024 * 1024,
        ),
        cost_estimate=cost,
    )(x2, tp, tm, ap, amh)

    return out.reshape(orig_shape[:-1] + (F,))


# --------------------------- pure-JAX reference -----------------------------

def drelu_reference(x, theta_plus, theta_minus, a_plus, a_minus):
    xf = x.astype(jnp.float32)
    zero = jnp.zeros_like(xf)
    pos = jnp.maximum(xf, zero)
    neg = jnp.minimum(xf, zero)
    return (a_plus * pos ** 2
            + 0.5 * a_minus * neg ** 2
            + theta_plus * pos
            + theta_minus * neg)


# -------------------------------- main -------------------------------------

if __name__ == "__main__":
    # Small, lane-friendly shapes: (batch, seq, in_features) = (2, 128, 128)
    B, S, F = 2, 128, 128

    key = jax.random.PRNGKey(0)
    k_x, k_tp, k_tm, k_ap, k_am = jax.random.split(key, 5)

    x = jax.random.normal(k_x, (B, S, F), jnp.float32)

    # Non-default parameters (the module allows passing tp/tm/ap/am explicitly)
    theta_plus = 0.1 * jax.random.normal(k_tp, (F,), jnp.float32)
    theta_minus = 0.1 * jax.random.normal(k_tm, (F,), jnp.float32)
    a_plus = 1.0 + 0.1 * jax.random.normal(k_ap, (F,), jnp.float32)
    a_minus = 1.0 + 0.1 * jax.random.normal(k_am, (F,), jnp.float32)

    out = jax.block_until_ready(
        drelu_pallas(x, theta_plus, theta_minus, a_plus, a_minus))
    out_ref = drelu_reference(x, theta_plus, theta_minus, a_plus, a_minus)

    assert out.shape == x.shape
    assert out.dtype == jnp.float32
    assert jnp.allclose(out, out_ref, atol=1e-5, rtol=1e-5)

    # Also check the module's default-parameter configuration (theta=0, a=1).
    out_def = jax.block_until_ready(
        drelu_pallas(x, jnp.zeros((F,)), jnp.zeros((F,)),
                     jnp.ones((F,)), jnp.ones((F,))))
    out_def_ref = drelu_reference(x, jnp.zeros((F,)), jnp.zeros((F,)),
                                  jnp.ones((F,)), jnp.ones((F,)))
    assert jnp.allclose(out_def, out_def_ref, atol=1e-5, rtol=1e-5)

    # Ragged row count (not a multiple of the tile) exercises Pallas masking.
    x_rag = jax.random.normal(k_x, (3, 37, F), jnp.float32)
    out_rag = jax.block_until_ready(
        drelu_pallas(x_rag, theta_plus, theta_minus, a_plus, a_minus))
    out_rag_ref = drelu_reference(x_rag, theta_plus, theta_minus, a_plus, a_minus)
    assert jnp.allclose(out_rag, out_rag_ref, atol=1e-5, rtol=1e-5)

    print("KERNEL_OK")
</pallas_src>

<mosaic_0001>
module attributes {stable_mosaic.version = 11 : i64} {
  func.func @drelu_kernel(%arg0: i32, %arg1: i32, %arg2: memref<128x128xf32, #tpu.memory_space<vmem>>, %arg3: memref<1x128xf32, #tpu.memory_space<vmem>>, %arg4: memref<1x128xf32, #tpu.memory_space<vmem>>, %arg5: memref<1x128xf32, #tpu.memory_space<vmem>>, %arg6: memref<1x128xf32, #tpu.memory_space<vmem>>, %arg7: memref<128x128xf32, #tpu.memory_space<vmem>>) attributes {dimension_semantics = [#tpu.dimension_semantics<parallel>, #tpu.dimension_semantics<parallel>], iteration_bounds = array<i64: 2, 1>, scalar_prefetch = 0 : i64, scratch_operands = 0 : i64, tpu.core_type = #tpu.core_type<tc>, window_params = [{transform_indices = @transform_0, window_bounds = array<i64: 128, 128>}, {transform_indices = @transform_1, window_bounds = array<i64: 1, 128>}, {transform_indices = @transform_2, window_bounds = array<i64: 1, 128>}, {transform_indices = @transform_3, window_bounds = array<i64: 1, 128>}, {transform_indices = @transform_4, window_bounds = array<i64: 1, 128>}, {transform_indices = @transform_5, window_bounds = array<i64: 128, 128>}]} {
    %c0 = arith.constant 0 : index
    %c0_0 = arith.constant 0 : index
    %0 = vector.load %arg2[%c0, %c0_0] : memref<128x128xf32, #tpu.memory_space<vmem>>, vector<128x128xf32>
    %cst = arith.constant 0.000000e+00 : f32
    %1 = vector.broadcast %cst : f32 to vector<128x128xf32>
    %2 = arith.maximumf %0, %1 : vector<128x128xf32>
    %3 = arith.minimumf %0, %1 : vector<128x128xf32>
    %c0_1 = arith.constant 0 : index
    %c0_2 = arith.constant 0 : index
    %4 = vector.load %arg5[%c0_1, %c0_2] : memref<1x128xf32, #tpu.memory_space<vmem>>, vector<1x128xf32>
    %c0_3 = arith.constant 0 : index
    %c0_4 = arith.constant 0 : index
    %5 = vector.load %arg6[%c0_3, %c0_4] : memref<1x128xf32, #tpu.memory_space<vmem>>, vector<1x128xf32>
    %c0_5 = arith.constant 0 : index
    %c0_6 = arith.constant 0 : index
    %6 = vector.load %arg3[%c0_5, %c0_6] : memref<1x128xf32, #tpu.memory_space<vmem>>, vector<1x128xf32>
    %c0_7 = arith.constant 0 : index
    %c0_8 = arith.constant 0 : index
    %7 = vector.load %arg4[%c0_7, %c0_8] : memref<1x128xf32, #tpu.memory_space<vmem>>, vector<1x128xf32>
    %8 = vector.broadcast %4 : vector<1x128xf32> to vector<128x128xf32>
    %9 = arith.mulf %8, %2 : vector<128x128xf32>
    %10 = vector.broadcast %6 : vector<1x128xf32> to vector<128x128xf32>
    %11 = arith.addf %9, %10 : vector<128x128xf32>
    %12 = arith.mulf %2, %11 : vector<128x128xf32>
    %13 = vector.broadcast %5 : vector<1x128xf32> to vector<128x128xf32>
    %14 = arith.mulf %13, %3 : vector<128x128xf32>
    %15 = vector.broadcast %7 : vector<1x128xf32> to vector<128x128xf32>
    %16 = arith.addf %14, %15 : vector<128x128xf32>
    %17 = arith.mulf %3, %16 : vector<128x128xf32>
    %18 = arith.addf %12, %17 : vector<128x128xf32>
    %c0_9 = arith.constant 0 : index
    %c0_10 = arith.constant 0 : index
    %19 = vector.load %arg7[%c0_9, %c0_10] : memref<128x128xf32, #tpu.memory_space<vmem>>, vector<128x128xf32>
    tpu.vector_store %arg7[%c0_9, %c0_10], %18 {strides = array<i32>} : memref<128x128xf32, #tpu.memory_space<vmem>>, vector<128x128xf32>,
    return
  }
  func.func @transform_0(%arg0: i32, %arg1: i32) -> (i32, i32) {
    %c0_i32 = arith.constant 0 : i32
    return %arg0, %arg1 : i32, i32
  }
  func.func @transform_1(%arg0: i32, %arg1: i32) -> (i32, i32) {
    %c0_i32 = arith.constant 0 : i32
    %c0_i32_0 = arith.constant 0 : i32
    return %c0_i32, %arg1 : i32, i32
  }
  func.func @transform_2(%arg0: i32, %arg1: i32) -> (i32, i32) {
    %c0_i32 = arith.constant 0 : i32
    %c0_i32_0 = arith.constant 0 : i32
    return %c0_i32, %arg1 : i32, i32
  }
  func.func @transform_3(%arg0: i32, %arg1: i32) -> (i32, i32) {
    %c0_i32 = arith.constant 0 : i32
    %c0_i32_0 = arith.constant 0 : i32
    return %c0_i32, %arg1 : i32, i32
  }
  func.func @transform_4(%arg0: i32, %arg1: i32) -> (i32, i32) {
    %c0_i32 = arith.constant 0 : i32
    %c0_i32_0 = arith.constant 0 : i32
    return %c0_i32, %arg1 : i32, i32
  }
  func.func @transform_5(%arg0: i32, %arg1: i32) -> (i32, i32) {
    %c0_i32 = arith.constant 0 : i32
    return %arg0, %arg1 : i32, i32
  }
}

</mosaic_0001>

<llo_original>
// kernel: tpu_custom_call.1
$region0: #{tpu_custom_call.1}
  #allocation0 [shape = 'u32[]', space=smem, size = 0x4, offset = 0x4, fixed_abs, tag = 'smem constant byte address 0x4 - core index']
  #allocation1 [shape = 'u32[144,128]{1,0:T(1,128)}', space=vmem, size = 0x12000, scoped, tag = 'internal scratch']
  %s0 = inlined_call_operand.hbm [shape: f32[256,128], index: 0, kind: input, shape index: {}]
  %s1 = inlined_call_operand.vmem [shape: f32[1,128], index: 1, kind: input, shape index: {}]
  %s2 = inlined_call_operand.vmem [shape: f32[1,128], index: 2, kind: input, shape index: {}]
  %s3 = inlined_call_operand.vmem [shape: f32[1,128], index: 3, kind: input, shape index: {}]
  %s4 = inlined_call_operand.vmem [shape: f32[1,128], index: 4, kind: input, shape index: {}]
  %s5 = inlined_call_operand.hbm [shape: f32[256,128], index: 5, kind: output, shape index: {}]
  %s6 = sld [smem:[#allocation0]]
  $region57: #{tpu_custom_call.1} parent=0
    _
  %s8 = ssub.s32 1, %s6
  %s9 = scalar_select 0, %s8, %s6
  $region1: #{tpu_custom_call.1} parent=0
    #allocation2 [shape = 'u8[131072]{0}', space=vmem, size = 0x20000, scoped, tag = 'input window, operand 0']
    #allocation3 [shape = 's32[2]{0}', space=sflag, size = 0x8, scoped, tag = 'scoped memory for tpu_custom_call.1']
    #allocation4 [shape = 's32[2]{0}', space=sflag, size = 0x8, scoped, tag = 'scoped memory for tpu_custom_call.1']
    #allocation5 [shape = 'u8[131072]{0}', space=vmem, size = 0x20000, scoped, tag = 'output window, operand 0']
    %10 = vsyncpa [#allocation3], 0
    %s11 = scalar_lea.sflag [#allocation3], 1
    %12 = vsyncpa %s11, 0
    %13 = vsyncpa [#allocation4], 0
    %s14 = scalar_lea.sflag [#allocation4], 1
    %15 = vsyncpa %s14, 0
    loop: start=0, step=1, limit=4
    $region2: #{tpu_custom_call.1} parent=1 // loop_pre_header
      _
    $region3: #{tpu_custom_call.1} parent=1 // loop_header
      %s17 = sphi 0, %s21
      %p18 = scmp.ge.s32.totalorder %s17, 4
      %s24 = sphi 0, %s36
      %s25 = sphi 0, %s32
      %s26 = sphi 0, %s24
      %s27 = sphi 0, %s25
      %s28 = sphi 0, %s26
      %s29 = sphi 0, %s27
      %s41 = sphi 0, %s43
      %s44 = sphi 0, %s41
      %s45 = sphi 0, %s44
      %s61 = sphi 0, %s45
      %s67 = sphi 0, %s69
      %s70 = sphi 0, %s67
      %s71 = sphi 0, %s70
      %s87 = sphi 0, %s71
      %s93 = sphi 0, %s95
      %s96 = sphi 0, %s93
      %s97 = sphi 0, %s96
      %s113 = sphi 0, %s97
      %s119 = sphi 0, %s121
      %s122 = sphi 0, %s119
      %s123 = sphi 0, %s122
      %s139 = sphi 0, %s123
      %s145 = sphi 0, %s147
      %s148 = sphi 0, %s145
      %s149 = sphi 0, %s148
      %s165 = sphi 0, %s149
      %s173 = sphi 0, %s175
      %s176 = sphi 0, %s173
      %s177 = sphi 0, %s176
      %s193 = sphi 0, %s177
    $region4: #{tpu_custom_call.1} parent=1 // loop_header_branch
      %20 = sbr.rel (%p18) target = $region8
    $region5: #{tpu_custom_call.1} parent=1 // loop_body
      %s22 = ssub.s32 %s17, 1
      %s23 = ssub.s32 %s17, 2
      %s30 = sadd.s32 1, %s25
      %p31 = scmp.ge.s32.totalorder %s30, 1
      %s32 = scalar_select %p31, 0, %s30
      %s33 = sadd.s32 1, %s24
      %s34 = scalar_select %p31, %s33, %s24
      %p35 = scmp.ge.s32.totalorder %s34, 2
      %s36 = scalar_select %p35, 0, %s34
      %s37 = ssub.s32 %s24, %s36
      %s38 = ssub.s32 %s25, %s32
      %s39 = sor.u32 %s37, %s38
      %p40 = scmp.eq.s32.totalorder %s39, 0
      %s42 = sadd.s32 %s41, 1
      %s43 = scalar_select %p40, %s41, %s42
      %p46 = pneg %p40
      %p47 = scmp.eq.s32.totalorder %s17, 1
      %p48 = por %p46, %p47
      %p49 = scmp.ne.s32.totalorder %s41, %s44
      %p50 = scmp.eq.s32.totalorder %s17, 0
      %p51 = por %p49, %p50
      %p52 = scmp.ne.s32.totalorder %s41, %s44
      %p53 = scmp.eq.s32.totalorder %s22, 1
      %p54 = por %p52, %p53
      %p55 = scmp.ne.s32.totalorder %s44, %s45
      %p56 = scmp.eq.s32.totalorder %s22, 0
      %p57 = por %p55, %p56
      %p58 = scmp.ne.s32.totalorder %s44, %s45
      %p59 = scmp.eq.s32.totalorder %s23, 1
      %p60 = por %p58, %p59
      %p62 = scmp.ne.s32.totalorder %s45, %s61
      %p63 = scmp.eq.s32.totalorder %s23, 0
      %p64 = por %p62, %p63
      %s65 = ssub.s32 %s25, %s32
      %p66 = scmp.eq.s32.totalorder %s65, 0
      %s68 = sadd.s32 %s67, 1
      %s69 = scalar_select %p66, %s67, %s68
      %p72 = pneg %p66
      %p73 = scmp.eq.s32.totalorder %s17, 1
      %p74 = por %p72, %p73
      %p75 = scmp.ne.s32.totalorder %s67, %s70
      %p76 = scmp.eq.s32.totalorder %s17, 0
      %p77 = por %p75, %p76
      %p78 = scmp.ne.s32.totalorder %s67, %s70
      %p79 = scmp.eq.s32.totalorder %s22, 1
      %p80 = por %p78, %p79
      %p81 = scmp.ne.s32.totalorder %s70, %s71
      %p82 = scmp.eq.s32.totalorder %s22, 0
      %p83 = por %p81, %p82
      %p84 = scmp.ne.s32.totalorder %s70, %s71
      %p85 = scmp.eq.s32.totalorder %s23, 1
      %p86 = por %p84, %p85
      %p88 = scmp.ne.s32.totalorder %s71, %s87
      %p89 = scmp.eq.s32.totalorder %s23, 0
      %p90 = por %p88, %p89
      %s91 = ssub.s32 %s25, %s32
      %p92 = scmp.eq.s32.totalorder %s91, 0
      %s94 = sadd.s32 %s93, 1
      %s95 = scalar_select %p92, %s93, %s94
      %p98 = pneg %p92
      %p99 = scmp.eq.s32.totalorder %s17, 1
      %p100 = por %p98, %p99
      %p101 = scmp.ne.s32.totalorder %s93, %s96
      %p102 = scmp.eq.s32.totalorder %s17, 0
      %p103 = por %p101, %p102
      %p104 = scmp.ne.s32.totalorder %s93, %s96
      %p105 = scmp.eq.s32.totalorder %s22, 1
      %p106 = por %p104, %p105
      %p107 = scmp.ne.s32.totalorder %s96, %s97
      %p108 = scmp.eq.s32.totalorder %s22, 0
      %p109 = por %p107, %p108
      %p110 = scmp.ne.s32.totalorder %s96, %s97
      %p111 = scmp.eq.s32.totalorder %s23, 1
      %p112 = por %p110, %p111
      %p114 = scmp.ne.s32.totalorder %s97, %s113
      %p115 = scmp.eq.s32.totalorder %s23, 0
      %p116 = por %p114, %p115
      %s117 = ssub.s32 %s25, %s32
      %p118 = scmp.eq.s32.totalorder %s117, 0
      %s120 = sadd.s32 %s119, 1
      %s121 = scalar_select %p118, %s119, %s120
      %p124 = pneg %p118
      %p125 = scmp.eq.s32.totalorder %s17, 1
      %p126 = por %p124, %p125
      %p127 = scmp.ne.s32.totalorder %s119, %s122
      %p128 = scmp.eq.s32.totalorder %s17, 0
      %p129 = por %p127, %p128
      %p130 = scmp.ne.s32.totalorder %s119, %s122
      %p131 = scmp.eq.s32.totalorder %s22, 1
      %p132 = por %p130, %p131
      %p133 = scmp.ne.s32.totalorder %s122, %s123
      %p134 = scmp.eq.s32.totalorder %s22, 0
      %p135 = por %p133, %p134
      %p136 = scmp.ne.s32.totalorder %s122, %s123
      %p137 = scmp.eq.s32.totalorder %s23, 1
      %p138 = por %p136, %p137
      %p140 = scmp.ne.s32.totalorder %s123, %s139
      %p141 = scmp.eq.s32.totalorder %s23, 0
      %p142 = por %p140, %p141
      %s143 = ssub.s32 %s25, %s32
      %p144 = scmp.eq.s32.totalorder %s143, 0
      %s146 = sadd.s32 %s145, 1
      %s147 = scalar_select %p144, %s145, %s146
      %p150 = pneg %p144
      %p151 = scmp.eq.s32.totalorder %s17, 1
      %p152 = por %p150, %p151
      %p153 = scmp.ne.s32.totalorder %s145, %s148
      %p154 = scmp.eq.s32.totalorder %s17, 0
      %p155 = por %p153, %p154
      %p156 = scmp.ne.s32.totalorder %s145, %s148
      %p157 = scmp.eq.s32.totalorder %s22, 1
      %p158 = por %p156, %p157
      %p159 = scmp.ne.s32.totalorder %s148, %s149
      %p160 = scmp.eq.s32.totalorder %s22, 0
      %p161 = por %p159, %p160
      %p162 = scmp.ne.s32.totalorder %s148, %s149
      %p163 = scmp.eq.s32.totalorder %s23, 1
      %p164 = por %p162, %p163
      %p166 = scmp.ne.s32.totalorder %s149, %s165
      %p167 = scmp.eq.s32.totalorder %s23, 0
      %p168 = por %p166, %p167
      %s169 = ssub.s32 %s24, %s36
      %s170 = ssub.s32 %s25, %s32
      %s171 = sor.u32 %s169, %s170
      %p172 = scmp.eq.s32.totalorder %s171, 0
      %s174 = sadd.s32 %s173, 1
      %s175 = scalar_select %p172, %s173, %s174
      %p178 = pneg %p172
      %p179 = scmp.eq.s32.totalorder %s17, 1
      %p180 = por %p178, %p179
      %p181 = scmp.ne.s32.totalorder %s173, %s176
      %p182 = scmp.eq.s32.totalorder %s17, 0
      %p183 = por %p181, %p182
      %p184 = scmp.ne.s32.totalorder %s173, %s176
      %p185 = scmp.eq.s32.totalorder %s22, 1
      %p186 = por %p184, %p185
      %p187 = scmp.ne.s32.totalorder %s176, %s177
      %p188 = scmp.eq.s32.totalorder %s22, 0
      %p189 = por %p187, %p188
      %p190 = scmp.ne.s32.totalorder %s176, %s177
      %p191 = scmp.eq.s32.totalorder %s23, 1
      %p192 = por %p190, %p191
      %p194 = scmp.ne.s32.totalorder %s177, %s193
      %p195 = scmp.eq.s32.totalorder %s23, 0
      %p196 = por %p194, %p195
      %p197 = scmp.le.s32.totalorder 1, %s17
      %p198 = scmp.lt.s32.totalorder %s17, 3
      %p199 = pnand %p197, %p198
      %p200 = pneg %p199
      // Predicated region
      $region9: #{tpu_custom_call.1} parent=5 // pred_check
        _
      $region10: #{tpu_custom_call.1} parent=5 // pred_check_branch
        %202 = sbr.rel (%p199) target = $region12
      $region11: #{tpu_custom_call.1} parent=5 // pred_region
        %s203 = ssub.s32 %s17, 1
        // Predicated region
        $region13: #{tpu_custom_call.1} parent=11 // pred_check
          %p204 = pneg %p83
        $region14: #{tpu_custom_call.1} parent=11 // pred_check_branch
          %206 = sbr.rel (%p204) target = $region16
        $region15: #{tpu_custom_call.1} parent=11 // pred_region
          %p207 = scmp.lt.s32.totalorder %s27, 0
          %s208 = scalar_select %p207, %s27, 0
          %s209 = scalar_lea.vmem %s1, %s208
        $region16: #{tpu_custom_call.1} parent=11 // pred_fallthru
          _
        // Predicated region
        $region17: #{tpu_custom_call.1} parent=11 // pred_check
          %p210 = pneg %p109
        $region18: #{tpu_custom_call.1} parent=11 // pred_check_branch
          %212 = sbr.rel (%p210) target = $region20
        $region19: #{tpu_custom_call.1} parent=11 // pred_region
          %p213 = scmp.lt.s32.totalorder %s27, 0
          %s214 = scalar_select %p213, %s27, 0
          %s215 = scalar_lea.vmem %s2, %s214
        $region20: #{tpu_custom_call.1} parent=11 // pred_fallthru
          _
        // Predicated region
        $region21: #{tpu_custom_call.1} parent=11 // pred_check
          %p216 = pneg %p135
        $region22: #{tpu_custom_call.1} parent=11 // pred_check_branch
          %218 = sbr.rel (%p216) target = $region24
        $region23: #{tpu_custom_call.1} parent=11 // pred_region
          %p219 = scmp.lt.s32.totalorder %s27, 0
          %s220 = scalar_select %p219, %s27, 0
          %s221 = scalar_lea.vmem %s3, %s220
        $region24: #{tpu_custom_call.1} parent=11 // pred_fallthru
          _
        // Predicated region
        $region25: #{tpu_custom_call.1} parent=11 // pred_check
          %p222 = pneg %p161
        $region26: #{tpu_custom_call.1} parent=11 // pred_check_branch
          %224 = sbr.rel (%p222) target = $region28
        $region27: #{tpu_custom_call.1} parent=11 // pred_region
          %p225 = scmp.lt.s32.totalorder %s27, 0
          %s226 = scalar_select %p225, %s27, 0
          %s227 = scalar_lea.vmem %s4, %s226
        $region28: #{tpu_custom_call.1} parent=11 // pred_fallthru
          _
      $region12: #{tpu_custom_call.1} parent=5 // pred_fallthru
        _
      %p228 = scmp.lt.s32.totalorder %s17, 2
      // Predicated region
      $region29: #{tpu_custom_call.1} parent=5 // pred_check
        %p229 = pneg %p228
      $region30: #{tpu_custom_call.1} parent=5 // pred_check_branch
        %231 = sbr.rel (%p229) target = $region32
      $region31: #{tpu_custom_call.1} parent=5 // pred_region
        // Predicated region
        $region33: #{tpu_custom_call.1} parent=31 // pred_check
          %p232 = pneg %p51
        $region34: #{tpu_custom_call.1} parent=31 // pred_check_branch
          %234 = sbr.rel (%p232) target = $region36
        $region35: #{tpu_custom_call.1} parent=31 // pred_region
          %s235 = sand.u32 %s41, 1
          %s236 = scalar_lea.sflag [#allocation3], %s235
          %s237 = sand.u32 %s41, 1
          %s238 = smul.addr %s237, 128
          %s239 = scalar_lea.vmem [#allocation2], %s238
          %s240 = smul.u32 16, %s24
          %s242 = ssub.s32 2048, 2048
          %243 = vsyncadd %s236, %s242
          %s244 = sadd.s32 %s25, %s240
          %s245 = smul.addr %s244, 128
          %s246 = scalar_lea.hbm %s0, %s245
          %s247 = sshll.u32 %s239, 4
          %s248 = int_to_ptr.vmem [resolvable:$true] %s247
          %253 = dma.hbm_to_vmem [thread:$0]  %s246, 2048, %s248, %s236, 128, 128, 8
        $region36: #{tpu_custom_call.1} parent=31 // pred_fallthru
          _
      $region32: #{tpu_custom_call.1} parent=5 // pred_fallthru
        _
      %p254 = scmp.le.s32.totalorder 1, %s17
      %p255 = scmp.lt.s32.totalorder %s17, 3
      %p256 = pnand %p254, %p255
      %p257 = pneg %p256
      // Predicated region
      $region37: #{tpu_custom_call.1} parent=5 // pred_check
        _
      $region38: #{tpu_custom_call.1} parent=5 // pred_check_branch
        %259 = sbr.rel (%p256) target = $region40
      $region39: #{tpu_custom_call.1} parent=5 // pred_region
        %s260 = ssub.s32 %s17, 1
        %s261 = sand.u32 %s44, 1
        %s262 = scalar_lea.sflag [#allocation3], %s261
        %s263 = sand.u32 %s44, 1
        %s264 = smul.addr %s263, 128
        %s265 = scalar_lea.vmem [#allocation2], %s264
        // Predicated region
        $region41: #{tpu_custom_call.1} parent=39 // pred_check
          %p266 = pneg %p57
        $region42: #{tpu_custom_call.1} parent=39 // pred_check_branch
          %268 = sbr.rel (%p266) target = $region44
        $region43: #{tpu_custom_call.1} parent=39 // pred_region
          %269 = dma.done %s262, 2048
        $region44: #{tpu_custom_call.1} parent=39 // pred_fallthru
          _
        %s270 = sand.u32 %s44, 1
        %s271 = scalar_lea.sflag [#allocation3], %s270
        %s272 = sand.u32 %s44, 1
        %s273 = smul.addr %s272, 128
        %s274 = scalar_lea.vmem [#allocation2], %s273
        %p275 = pneg %p57
        %p276 = pneg %p54
        %p277 = scmp.lt.s32.totalorder %s27, 0
        %s278 = scalar_select %p277, %s27, 0
        %s279 = scalar_lea.vmem %s1, %s278
        %p280 = pneg %p83
        %p281 = pneg %p80
        %p282 = scmp.lt.s32.totalorder %s27, 0
        %s283 = scalar_select %p282, %s27, 0
        %s284 = scalar_lea.vmem %s2, %s283
        %p285 = pneg %p109
        %p286 = pneg %p106
        %p287 = scmp.lt.s32.totalorder %s27, 0
        %s288 = scalar_select %p287, %s27, 0
        %s289 = scalar_lea.vmem %s3, %s288
        %p290 = pneg %p135
        %p291 = pneg %p132
        %p292 = scmp.lt.s32.totalorder %s27, 0
        %s293 = scalar_select %p292, %s27, 0
        %s294 = scalar_lea.vmem %s4, %s293
        %p295 = pneg %p161
        %p296 = pneg %p158
        %p297 = pneg %p189
        %p298 = pneg %p186
        %s299 = sand.u32 %s176, 1
        %s300 = scalar_lea.sflag [#allocation4], %s299
        %s301 = sand.u32 %s176, 1
        %s302 = smul.addr %s301, 128
        %s303 = scalar_lea.vmem [#allocation5], %s302
        %s304 = smul.u32 16, %s26
        %p305 = scmp.lt.s32.totalorder %s27, 0
        %s306 = scalar_select %p305, %s27, 0
        %s307 = scalar_lea.vmem %s1, %s306
        %p308 = scmp.lt.s32.totalorder %s27, 0
        %s309 = scalar_select %p308, %s27, 0
        %s310 = scalar_lea.vmem %s2, %s309
        %p311 = scmp.lt.s32.totalorder %s27, 0
        %s312 = scalar_select %p311, %s27, 0
        %s313 = scalar_lea.vmem %s3, %s312
        %p314 = scmp.lt.s32.totalorder %s27, 0
        %s315 = scalar_select %p314, %s27, 0
        %s316 = scalar_lea.vmem %s4, %s315
        %s317 = smul.u32 16, %s26
        %v318 = vld [vmem:[%s265] sm:$0xff]
        %v319 = vld [vmem:[%s265 + $0x8] sm:$0xff]
        %v320 = vld [vmem:[%s265 + $0x10] sm:$0xff]
        %v321 = vld [vmem:[%s265 + $0x18] sm:$0xff]
        %v322 = vld [vmem:[%s265 + $0x20] sm:$0xff]
        %v323 = vld [vmem:[%s265 + $0x28] sm:$0xff]
        %v324 = vld [vmem:[%s265 + $0x30] sm:$0xff]
        %v325 = vld [vmem:[%s265 + $0x38] sm:$0xff]
        %v326 = vld [vmem:[%s265 + $0x40] sm:$0xff]
        %v327 = vld [vmem:[%s265 + $0x48] sm:$0xff]
        %v328 = vld [vmem:[%s265 + $0x50] sm:$0xff]
        %v329 = vld [vmem:[%s265 + $0x58] sm:$0xff]
        %v330 = vld [vmem:[%s265 + $0x60] sm:$0xff]
        %v331 = vld [vmem:[%s265 + $0x68] sm:$0xff]
        %v332 = vld [vmem:[%s265 + $0x70] sm:$0xff]
        %v333 = vld [vmem:[%s265 + $0x78] sm:$0xff]
        %v334 = vmax.f32 %v318, 0.0
        %v335 = vmax.f32 %v319, 0.0
        %v336 = vmax.f32 %v320, 0.0
        %v337 = vmax.f32 %v321, 0.0
        %v338 = vmax.f32 %v322, 0.0
        %v339 = vmax.f32 %v323, 0.0
        %v340 = vmax.f32 %v324, 0.0
        %v341 = vmax.f32 %v325, 0.0
        %v342 = vmax.f32 %v326, 0.0
        %v343 = vmax.f32 %v327, 0.0
        %v344 = vmax.f32 %v328, 0.0
        %v345 = vmax.f32 %v329, 0.0
        %v346 = vmax.f32 %v330, 0.0
        %v347 = vmax.f32 %v331, 0.0
        %v348 = vmax.f32 %v332, 0.0
        %v349 = vmax.f32 %v333, 0.0
        %v350 = vmin.f32 %v318, 0.0
        %v351 = vmin.f32 %v319, 0.0
        %v352 = vmin.f32 %v320, 0.0
        %v353 = vmin.f32 %v321, 0.0
        %v354 = vmin.f32 %v322, 0.0
        %v355 = vmin.f32 %v323, 0.0
        %v356 = vmin.f32 %v324, 0.0
        %v357 = vmin.f32 %v325, 0.0
        %v358 = vmin.f32 %v326, 0.0
        %v359 = vmin.f32 %v327, 0.0
        %v360 = vmin.f32 %v328, 0.0
        %v361 = vmin.f32 %v329, 0.0
        %v362 = vmin.f32 %v330, 0.0
        %v363 = vmin.f32 %v331, 0.0
        %v364 = vmin.f32 %v332, 0.0
        %v365 = vmin.f32 %v333, 0.0
        %v366 = vld [vmem:[%s313] sm:$0x1]
        %v367 = vld [vmem:[%s316] sm:$0x1]
        %v368 = vld [vmem:[%s307] sm:$0x1]
        %v369 = vld [vmem:[%s310] sm:$0x1]
        %v371 = vlaneseq
        %v372 = vshrl.u32 %v371, 7
        %v373 = vsub.s32 0, %v372
        %v374 = vrot.slane %v366, %v373
        %v376 = vmul.f32 %v374, %v334
        %v377 = vmul.f32 %v374, %v335
        %v378 = vmul.f32 %v374, %v336
        %v379 = vmul.f32 %v374, %v337
        %v380 = vmul.f32 %v374, %v338
        %v381 = vmul.f32 %v374, %v339
        %v382 = vmul.f32 %v374, %v340
        %v383 = vmul.f32 %v374, %v341
        %v384 = vmul.f32 %v374, %v342
        %v385 = vmul.f32 %v374, %v343
        %v386 = vmul.f32 %v374, %v344
        %v387 = vmul.f32 %v374, %v345
        %v388 = vmul.f32 %v374, %v346
        %v389 = vmul.f32 %v374, %v347
        %v390 = vmul.f32 %v374, %v348
        %v391 = vmul.f32 %v374, %v349
        %v393 = vlaneseq
        %v394 = vshrl.u32 %v393, 7
        %v395 = vsub.s32 0, %v394
        %v396 = vrot.slane %v368, %v395
        %v398 = vadd.f32 %v376, %v396
        %v399 = vadd.f32 %v377, %v396
        %v400 = vadd.f32 %v378, %v396
        %v401 = vadd.f32 %v379, %v396
        %v402 = vadd.f32 %v380, %v396
        %v403 = vadd.f32 %v381, %v396
        %v404 = vadd.f32 %v382, %v396
        %v405 = vadd.f32 %v383, %v396
        %v406 = vadd.f32 %v384, %v396
        %v407 = vadd.f32 %v385, %v396
        %v408 = vadd.f32 %v386, %v396
        %v409 = vadd.f32 %v387, %v396
        %v410 = vadd.f32 %v388, %v396
        %v411 = vadd.f32 %v389, %v396
        %v412 = vadd.f32 %v390, %v396
        %v413 = vadd.f32 %v391, %v396
        %v414 = vmul.f32 %v334, %v398
        %v415 = vmul.f32 %v335, %v399
        %v416 = vmul.f32 %v336, %v400
        %v417 = vmul.f32 %v337, %v401
        %v418 = vmul.f32 %v338, %v402
        %v419 = vmul.f32 %v339, %v403
        %v420 = vmul.f32 %v340, %v404
        %v421 = vmul.f32 %v341, %v405
        %v422 = vmul.f32 %v342, %v406
        %v423 = vmul.f32 %v343, %v407
        %v424 = vmul.f32 %v344, %v408
        %v425 = vmul.f32 %v345, %v409
        %v426 = vmul.f32 %v346, %v410
        %v427 = vmul.f32 %v347, %v411
        %v428 = vmul.f32 %v348, %v412
        %v429 = vmul.f32 %v349, %v413
        %v431 = vlaneseq
        %v432 = vshrl.u32 %v431, 7
        %v433 = vsub.s32 0, %v432
        %v434 = vrot.slane %v367, %v433
        %v436 = vmul.f32 %v434, %v350
        %v437 = vmul.f32 %v434, %v351
        %v438 = vmul.f32 %v434, %v352
        %v439 = vmul.f32 %v434, %v353
        %v440 = vmul.f32 %v434, %v354
        %v441 = vmul.f32 %v434, %v355
        %v442 = vmul.f32 %v434, %v356
        %v443 = vmul.f32 %v434, %v357
        %v444 = vmul.f32 %v434, %v358
        %v445 = vmul.f32 %v434, %v359
        %v446 = vmul.f32 %v434, %v360
        %v447 = vmul.f32 %v434, %v361
        %v448 = vmul.f32 %v434, %v362
        %v449 = vmul.f32 %v434, %v363
        %v450 = vmul.f32 %v434, %v364
        %v451 = vmul.f32 %v434, %v365
        %v453 = vlaneseq
        %v454 = vshrl.u32 %v453, 7
        %v455 = vsub.s32 0, %v454
        %v456 = vrot.slane %v369, %v455
        %v458 = vadd.f32 %v436, %v456
        %v459 = vadd.f32 %v437, %v456
        %v460 = vadd.f32 %v438, %v456
        %v461 = vadd.f32 %v439, %v456
        %v462 = vadd.f32 %v440, %v456
        %v463 = vadd.f32 %v441, %v456
        %v464 = vadd.f32 %v442, %v456
        %v465 = vadd.f32 %v443, %v456
        %v466 = vadd.f32 %v444, %v456
        %v467 = vadd.f32 %v445, %v456
        %v468 = vadd.f32 %v446, %v456
        %v469 = vadd.f32 %v447, %v456
        %v470 = vadd.f32 %v448, %v456
        %v471 = vadd.f32 %v449, %v456
        %v472 = vadd.f32 %v450, %v456
        %v473 = vadd.f32 %v451, %v456
        %v474 = vmul.f32 %v350, %v458
        %v475 = vmul.f32 %v351, %v459
        %v476 = vmul.f32 %v352, %v460
        %v477 = vmul.f32 %v353, %v461
        %v478 = vmul.f32 %v354, %v462
        %v479 = vmul.f32 %v355, %v463
        %v480 = vmul.f32 %v356, %v464
        %v481 = vmul.f32 %v357, %v465
        %v482 = vmul.f32 %v358, %v466
        %v483 = vmul.f32 %v359, %v467
        %v484 = vmul.f32 %v360, %v468
        %v485 = vmul.f32 %v361, %v469
        %v486 = vmul.f32 %v362, %v470
        %v487 = vmul.f32 %v363, %v471
        %v488 = vmul.f32 %v364, %v472
        %v489 = vmul.f32 %v365, %v473
        %v490 = vadd.f32 %v414, %v474
        %v491 = vadd.f32 %v415, %v475
        %v492 = vadd.f32 %v416, %v476
        %v493 = vadd.f32 %v417, %v477
        %v494 = vadd.f32 %v418, %v478
        %v495 = vadd.f32 %v419, %v479
        %v496 = vadd.f32 %v420, %v480
        %v497 = vadd.f32 %v421, %v481
        %v498 = vadd.f32 %v422, %v482
        %v499 = vadd.f32 %v423, %v483
        %v500 = vadd.f32 %v424, %v484
        %v501 = vadd.f32 %v425, %v485
        %v502 = vadd.f32 %v426, %v486
        %v503 = vadd.f32 %v427, %v487
        %v504 = vadd.f32 %v428, %v488
        %v505 = vadd.f32 %v429, %v489
        %506 = vst [vmem:[%s303] sm:$0xff] %v490
        %507 = vst [vmem:[%s303 + $0x8] sm:$0xff] %v491
        %508 = vst [vmem:[%s303 + $0x10] sm:$0xff] %v492
        %509 = vst [vmem:[%s303 + $0x18] sm:$0xff] %v493
        %510 = vst [vmem:[%s303 + $0x20] sm:$0xff] %v494
        %511 = vst [vmem:[%s303 + $0x28] sm:$0xff] %v495
        %512 = vst [vmem:[%s303 + $0x30] sm:$0xff] %v496
        %513 = vst [vmem:[%s303 + $0x38] sm:$0xff] %v497
        %514 = vst [vmem:[%s303 + $0x40] sm:$0xff] %v498
        %515 = vst [vmem:[%s303 + $0x48] sm:$0xff] %v499
        %516 = vst [vmem:[%s303 + $0x50] sm:$0xff] %v500
        %517 = vst [vmem:[%s303 + $0x58] sm:$0xff] %v501
        %518 = vst [vmem:[%s303 + $0x60] sm:$0xff] %v502
        %519 = vst [vmem:[%s303 + $0x68] sm:$0xff] %v503
        %520 = vst [vmem:[%s303 + $0x70] sm:$0xff] %v504
        %521 = vst [vmem:[%s303 + $0x78] sm:$0xff] %v505
        %s522 = sand.u32 %s176, 1
        %s523 = scalar_lea.sflag [#allocation4], %s522
        %s524 = sand.u32 %s176, 1
        %s525 = smul.addr %s524, 128
        %s526 = scalar_lea.vmem [#allocation5], %s525
        // Predicated region
        $region45: #{tpu_custom_call.1} parent=39 // pred_check
          %p527 = pneg %p186
        $region46: #{tpu_custom_call.1} parent=39 // pred_check_branch
          %529 = sbr.rel (%p527) target = $region48
        $region47: #{tpu_custom_call.1} parent=39 // pred_region
          %s530 = smul.u32 16, %s26
          %s532 = ssub.s32 2048, 2048
          %533 = vsyncadd %s523, %s532
          %s534 = sadd.s32 %s27, %s530
          %s535 = smul.addr %s534, 128
          %s536 = scalar_lea.hbm %s5, %s535
          %s537 = sshll.u32 %s526, 4
          %s538 = int_to_ptr.vmem [resolvable:$true] %s537
          %543 = dma.vmem_to_hbm [thread:$0]  %s538, 2048, %s536, %s523, 128, 128, 8
        $region48: #{tpu_custom_call.1} parent=39 // pred_fallthru
          _
      $region40: #{tpu_custom_call.1} parent=5 // pred_fallthru
        _
      %p544 = scmp.le.s32.totalorder 2, %s17
      // Predicated region
      $region49: #{tpu_custom_call.1} parent=5 // pred_check
        %p545 = pneg %p544
      $region50: #{tpu_custom_call.1} parent=5 // pred_check_branch
        %547 = sbr.rel (%p545) target = $region52
      $region51: #{tpu_custom_call.1} parent=5 // pred_region
        %s548 = ssub.s32 %s17, 2
        // Predicated region
        $region53: #{tpu_custom_call.1} parent=51 // pred_check
          %p549 = pneg %p192
        $region54: #{tpu_custom_call.1} parent=51 // pred_check_branch
          %551 = sbr.rel (%p549) target = $region56
        $region55: #{tpu_custom_call.1} parent=51 // pred_region
          %s552 = sand.u32 %s177, 1
          %s553 = scalar_lea.sflag [#allocation4], %s552
          %s554 = sand.u32 %s177, 1
          %s555 = smul.addr %s554, 128
          %s556 = scalar_lea.vmem [#allocation5], %s555
          %557 = dma.done %s553, 2048
        $region56: #{tpu_custom_call.1} parent=51 // pred_fallthru
          _
      $region52: #{tpu_custom_call.1} parent=5 // pred_fallthru
        _
    $region6: #{tpu_custom_call.1} parent=1 // loop_footer
      %s21 = sadd.s32 1, %s17
    $region7: #{tpu_custom_call.1} parent=1 // loop_footer_branch
      %16 = sbr.rel target = $region3
    $region8: #{tpu_custom_call.1} parent=1 // loop_exit
      _
    %558 = vsyncpa [#allocation3], 1
    %s559 = scalar_lea.sflag [#allocation3], 1
    %560 = vsyncpa %s559, 1
    %561 = vsyncpa [#allocation4], 1
    %s562 = scalar_lea.sflag [#allocation4], 1
    %563 = vsyncpa %s562, 1

</llo_original>
